<compile_context>
chip_gen: v7x
topology: tpu7x:2x2x1
jax: 0.10.0
libtpu: 0.0.40
codegen_flags: <defaults>
</compile_context>

<pallas_src>
import jax
import jax.numpy as jnp
from jax.experimental import pallas as pl
from jax.experimental.pallas import tpu as pltpu


_EPS = 1e-5
_TARGET_BLOCK_BYTES = 4 * 1024 * 1024   # ~4 MiB activation block (x; out matches)
_VMEM_LIMIT_BYTES = 48 * 1024 * 1024    # fits v7x's 64 MiB VMEM with headroom


def _fbn_kernel(scale_ref, shift_ref, x_ref, o_ref):
    # scale/shift: (tile_r, 1) f32 ; x/o: (tile_r, tile_c) in activation dtype.
    # Single broadcasted FMA on the VPU; cast back to the activation dtype.
    o_ref[...] = (x_ref[...] * scale_ref[...] + shift_ref[...]).astype(o_ref.dtype)


def _choose_tiles(rows, cols, itemsize):
    """Pick (tile_r, tile_c): lane-dense, 8/128-legal, ~_TARGET_BLOCK_BYTES."""
    target_elems = max(1, _TARGET_BLOCK_BYTES // itemsize)

    if cols % 128 == 0 and cols > 128:
        # Lane tile: large multiple of 128, sized so at least 8 rows still fit.
        max_c = max(128, ((target_elems // 8) // 128) * 128)
        tile_c = min(cols, max_c)
    else:
        # Full lane extent (legal for any width; required when cols % 128 != 0).
        tile_c = cols

    budget_r = max(8, ((target_elems // max(tile_c, 1)) // 8) * 8)
    if rows < 8:
        tile_r = rows                      # full row extent (always legal)
    else:
        tile_r = min((rows // 8) * 8, budget_r)   # multiple of 8; ragged last
    return tile_r, tile_c


def frozen_batch_norm_2d(x, weight, bias, running_mean, running_var):
    """x: (N, C, H, W). weight/bias/running_mean/running_var: (C,)."""
    N, C, H, W = x.shape
    rows, cols = N * C, H * W
    x2 = x.reshape(rows, cols)

    # Fold the four per-channel buffers into y = x * scale + shift (f32).
    w = weight.astype(jnp.float32)
    b = bias.astype(jnp.float32)
    rm = running_mean.astype(jnp.float32)
    rv = running_var.astype(jnp.float32)
    scale_c = w * jax.lax.rsqrt(rv + jnp.float32(_EPS))   # (C,)
    shift_c = b - rm * scale_c                            # (C,)

    def expand(p):
        # (C,) -> (N*C, 1): per-channel value repeated per batch row.
        return jnp.broadcast_to(p[None, :], (N, C)).reshape(rows, 1)

    scale2, shift2 = expand(scale_c), expand(shift_c)

    itemsize = jnp.dtype(x.dtype).itemsize
    tile_r, tile_c = _choose_tiles(rows, cols, itemsize)
    grid = (pl.cdiv(rows, tile_r), pl.cdiv(cols, tile_c))

    p_spec = pl.BlockSpec((tile_r, 1), lambda i, j: (i, 0))
    x_spec = pl.BlockSpec((tile_r, tile_c), lambda i, j: (i, j))

    out2 = pl.pallas_call(
        _fbn_kernel,
        out_shape=jax.ShapeDtypeStruct((rows, cols), x.dtype),
        grid_spec=pltpu.PrefetchScalarGridSpec(
            num_scalar_prefetch=0,
            grid=grid,
            in_specs=[p_spec, p_spec, x_spec],
            out_specs=x_spec,
        ),
        compiler_params=pltpu.CompilerParams(
            dimension_semantics=("parallel", "parallel"),
            vmem_limit_bytes=_VMEM_LIMIT_BYTES,
        ),
        cost_estimate=pl.CostEstimate(
            flops=2 * rows * cols,
            transcendentals=0,
            bytes_accessed=2 * rows * cols * itemsize + 2 * rows * 4,
        ),
    )(scale2, shift2, x2)

    return out2.reshape(N, C, H, W)


def _reference(x, weight, bias, running_mean, running_var):
    eps = 1e-5
    w = weight.reshape(1, -1, 1, 1).astype(jnp.float32)
    b = bias.reshape(1, -1, 1, 1).astype(jnp.float32)
    rv = running_var.reshape(1, -1, 1, 1).astype(jnp.float32)
    rm = running_mean.reshape(1, -1, 1, 1).astype(jnp.float32)
    scale = w * jax.lax.rsqrt(rv + eps)
    shift = b - rm * scale
    return x.astype(jnp.float32) * scale + shift


def _make_inputs(key, N, C, H, W, dtype):
    k_x, k_w, k_b, k_rm, k_rv = jax.random.split(key, 5)
    x = jax.random.normal(k_x, (N, C, H, W), dtype=jnp.float32).astype(dtype)
    weight = 1.0 + 0.1 * jax.random.normal(k_w, (C,), dtype=jnp.float32)
    bias = 0.1 * jax.random.normal(k_b, (C,), dtype=jnp.float32)
    running_mean = 0.5 * jax.random.normal(k_rm, (C,), dtype=jnp.float32)
    running_var = jnp.abs(1.0 + 0.2 * jax.random.normal(k_rv, (C,), dtype=jnp.float32))
    return x, weight, bias, running_mean, running_var


def _check(key, N, C, H, W, dtype, atol, rtol):
    x, w, b, rm, rv = _make_inputs(key, N, C, H, W, dtype)
    out = frozen_batch_norm_2d(x, w, b, rm, rv)
    out = jax.block_until_ready(out)
    ref = _reference(x, w, b, rm, rv)
    assert out.shape == x.shape and out.dtype == x.dtype
    assert jnp.allclose(out.astype(jnp.float32), ref, atol=atol, rtol=rtol), (
        f"mismatch vs reference for shape {(N, C, H, W)} dtype {dtype}"
    )


if __name__ == "__main__":
    key = jax.random.PRNGKey(0)
    keys = jax.random.split(key, 4)

    # Primary small shape consistent with the module's forward (NCHW).
    _check(keys[0], 2, 4, 16, 16, jnp.float32, atol=1e-5, rtol=1e-5)
    # Sub-128 spatial (7x7 tail) -> full-width lane block.
    _check(keys[1], 2, 8, 7, 7, jnp.float32, atol=1e-5, rtol=1e-5)
    # Fewer than 8 rows -> full-extent row block.
    _check(keys[2], 1, 3, 16, 16, jnp.float32, atol=1e-5, rtol=1e-5)
    # bf16 activations pass through end-to-end (scale/shift stay f32).
    _check(keys[3], 2, 4, 16, 16, jnp.bfloat16, atol=5e-2, rtol=5e-2)

    print("KERNEL_OK")
</pallas_src>

<mosaic_0001>
module attributes {stable_mosaic.version = 11 : i64} {
  func.func @_fbn_kernel(%arg0: i32, %arg1: i32, %arg2: memref<8x1xf32, #tpu.memory_space<vmem>>, %arg3: memref<8x1xf32, #tpu.memory_space<vmem>>, %arg4: memref<8x256xf32, #tpu.memory_space<vmem>>, %arg5: memref<8x256xf32, #tpu.memory_space<vmem>>) attributes {dimension_semantics = [#tpu.dimension_semantics<parallel>, #tpu.dimension_semantics<parallel>], iteration_bounds = array<i64: 1, 1>, scalar_prefetch = 0 : i64, scratch_operands = 0 : i64, tpu.core_type = #tpu.core_type<tc>, window_params = [{transform_indices = @transform_0, window_bounds = array<i64: 8, 1>}, {transform_indices = @transform_1, window_bounds = array<i64: 8, 1>}, {transform_indices = @transform_2, window_bounds = array<i64: 8, 256>}, {transform_indices = @transform_3, window_bounds = array<i64: 8, 256>}]} {
    %c0 = arith.constant 0 : index
    %c0_0 = arith.constant 0 : index
    %0 = vector.load %arg4[%c0, %c0_0] : memref<8x256xf32, #tpu.memory_space<vmem>>, vector<8x256xf32>
    %c0_1 = arith.constant 0 : index
    %c0_2 = arith.constant 0 : index
    %1 = vector.load %arg2[%c0_1, %c0_2] : memref<8x1xf32, #tpu.memory_space<vmem>>, vector<8x1xf32>
    %2 = vector.broadcast %1 : vector<8x1xf32> to vector<8x256xf32>
    %3 = arith.mulf %0, %2 : vector<8x256xf32>
    %c0_3 = arith.constant 0 : index
    %c0_4 = arith.constant 0 : index
    %4 = vector.load %arg3[%c0_3, %c0_4] : memref<8x1xf32, #tpu.memory_space<vmem>>, vector<8x1xf32>
    %5 = vector.broadcast %4 : vector<8x1xf32> to vector<8x256xf32>
    %6 = arith.addf %3, %5 : vector<8x256xf32>
    %c0_5 = arith.constant 0 : index
    %c0_6 = arith.constant 0 : index
    %7 = vector.load %arg5[%c0_5, %c0_6] : memref<8x256xf32, #tpu.memory_space<vmem>>, vector<8x256xf32>
    tpu.vector_store %arg5[%c0_5, %c0_6], %6 {strides = array<i32>} : memref<8x256xf32, #tpu.memory_space<vmem>>, vector<8x256xf32>,
    return
  }
  func.func @transform_0(%arg0: i32, %arg1: i32) -> (i32, i32) {
    %c0_i32 = arith.constant 0 : i32
    %c0_i32_0 = arith.constant 0 : i32
    return %arg0, %c0_i32 : i32, i32
  }
  func.func @transform_1(%arg0: i32, %arg1: i32) -> (i32, i32) {
    %c0_i32 = arith.constant 0 : i32
    %c0_i32_0 = arith.constant 0 : i32
    return %arg0, %c0_i32 : i32, i32
  }
  func.func @transform_2(%arg0: i32, %arg1: i32) -> (i32, i32) {
    %c0_i32 = arith.constant 0 : i32
    return %arg0, %arg1 : i32, i32
  }
  func.func @transform_3(%arg0: i32, %arg1: i32) -> (i32, i32) {
    %c0_i32 = arith.constant 0 : i32
    return %arg0, %arg1 : i32, i32
  }
}

</mosaic_0001>

<llo_original>
// kernel: tpu_custom_call.1
$region0: #{tpu_custom_call.1}
  #allocation0 [shape = 'u32[]', space=smem, size = 0x4, offset = 0x4, fixed_abs, tag = 'smem constant byte address 0x4 - core index']
  #allocation1 [shape = 'u32[144,128]{1,0:T(1,128)}', space=vmem, size = 0x12000, scoped, tag = 'internal scratch']
  %s0 = inlined_call_operand.vmem [shape: f32[8,1], index: 0, kind: input, shape index: {}]
  %s1 = inlined_call_operand.vmem [shape: f32[8,1], index: 1, kind: input, shape index: {}]
  %s2 = inlined_call_operand.vmem [shape: f32[8,256], index: 2, kind: input, shape index: {}]
  %s3 = inlined_call_operand.hbm [shape: f32[8,256], index: 3, kind: output, shape index: {}]
  %s4 = sld [smem:[#allocation0]]
  $region22: #{tpu_custom_call.1} parent=0
    _
  %s6 = ssub.s32 1, %s4
  %s7 = scalar_select 0, %s6, %s4
  $region1: #{tpu_custom_call.1} parent=0
    #allocation2 [shape = 'u8[8192]{0}', space=vmem, size = 0x2000, scoped, tag = 'output window, operand 0, single buffered']
    #allocation3 [shape = 's32[1]{0}', space=sflag, size = 0x4, scoped, tag = 'scoped memory for tpu_custom_call.1']
    %8 = vsyncpa [#allocation3], 0
    // Predicated region
    $region2: #{tpu_custom_call.1} parent=1 // pred_check
      _
    $region3: #{tpu_custom_call.1} parent=1 // pred_check_branch
      %10 = sbr.rel (0) target = $region5
    $region4: #{tpu_custom_call.1} parent=1 // pred_region
      _
    $region5: #{tpu_custom_call.1} parent=1 // pred_fallthru
      _
    // Predicated region
    $region6: #{tpu_custom_call.1} parent=1 // pred_check
      _
    $region7: #{tpu_custom_call.1} parent=1 // pred_check_branch
      %12 = sbr.rel (0) target = $region9
    $region8: #{tpu_custom_call.1} parent=1 // pred_region
      _
    $region9: #{tpu_custom_call.1} parent=1 // pred_fallthru
      _
    // Predicated region
    $region10: #{tpu_custom_call.1} parent=1 // pred_check
      _
    $region11: #{tpu_custom_call.1} parent=1 // pred_check_branch
      %14 = sbr.rel (0) target = $region13
    $region12: #{tpu_custom_call.1} parent=1 // pred_region
      _
    $region13: #{tpu_custom_call.1} parent=1 // pred_fallthru
      _
    %v15 = vld [vmem:[%s2] sm:$0xff]
    %v16 = vld [vmem:[%s2 + $0x8] sm:$0xff]
    %v17 = vld [vmem:[%s0] sm:$0xff]
    %19 = vset.pattern.permute.xlu0 0
    %20 = vperm.xlu0 %19, %v17
    %v21 = vpop.permute.xlu0 %20
    %v23 = vmul.f32 %v15, %v21
    %v24 = vmul.f32 %v16, %v21
    %v25 = vld [vmem:[%s1] sm:$0xff]
    %27 = vset.pattern.permute.xlu0 0
    %28 = vperm.xlu0 %27, %v25
    %v29 = vpop.permute.xlu0 %28
    %v31 = vadd.f32 %v23, %v29
    %v32 = vadd.f32 %v24, %v29
    %33 = vst [vmem:[#allocation2] sm:$0xff] %v31
    %34 = vst [vmem:[#allocation2 + $0x8] sm:$0xff] %v32
    // Predicated region
    $region14: #{tpu_custom_call.1} parent=1 // pred_check
      _
    $region15: #{tpu_custom_call.1} parent=1 // pred_check_branch
      %36 = sbr.rel (0) target = $region17
    $region16: #{tpu_custom_call.1} parent=1 // pred_region
      %s38 = ssub.s32 256, 256
      %39 = vsyncadd [#allocation3], %s38
      %s41 = sshll.u32 [#allocation2], 4
      %s42 = int_to_ptr.vmem [resolvable:$true] %s41
      %44 = dma.vmem_to_hbm [thread:$0]  %s42, 256, %s3, [#allocation3]
    $region17: #{tpu_custom_call.1} parent=1 // pred_fallthru
      _
    // Predicated region
    $region18: #{tpu_custom_call.1} parent=1 // pred_check
      _
    $region19: #{tpu_custom_call.1} parent=1 // pred_check_branch
      %46 = sbr.rel (0) target = $region21
    $region20: #{tpu_custom_call.1} parent=1 // pred_region
      %47 = dma.done [#allocation3], 256
    $region21: #{tpu_custom_call.1} parent=1 // pred_fallthru
      _
    %48 = vsyncpa [#allocation3], 1

</llo_original>
